<compile_context>
chip_gen: v5e
topology: v5e:2x2
jax: 0.10.0
libtpu: 0.0.40
codegen_flags: <defaults>
</compile_context>

<pallas_src>
import jax
import jax.numpy as jnp
from jax.experimental import pallas as pl
from jax.experimental.pallas import tpu as pltpu


def _round_up(n, m):
    return ((n + m - 1) // m) * m


def _mlp_kernel(x_ref,
                w1_ref, b1_ref,
                w2_ref, b2_ref,
                w3_ref, b3_ref,
                w4_ref, b4_ref,
                out_ref):
    # All-f32 pipeline: MXU accumulates in f32, bias-add / ReLU on the VPU.
    x = x_ref[...]                                                  # (TB, 24) f32

    h = jnp.dot(x, w1_ref[...], preferred_element_type=jnp.float32) + b1_ref[...]
    h = jnp.maximum(h, 0.0)
    # Dropout(0.3): identity in eval mode.
    # TODO(synk): training-mode dropout would need pltpu.prng_seed/prng_random_bits masking.

    h = jnp.dot(h, w2_ref[...], preferred_element_type=jnp.float32) + b2_ref[...]
    h = jnp.maximum(h, 0.0)
    # Dropout(0.2): identity in eval mode.

    h = jnp.dot(h, w3_ref[...], preferred_element_type=jnp.float32) + b3_ref[...]
    h = jnp.maximum(h, 0.0)

    h = jnp.dot(h, w4_ref[...], preferred_element_type=jnp.float32) + b4_ref[...]

    out_ref[...] = h.astype(out_ref.dtype)                          # (TB, 2) f32


def simple_file_security_net(x, params, *, batch_tile=2048):
    """x: (B, 24) float32. params: weights (in,out) f32 and biases (1,out) f32."""
    B, F = x.shape

    # Batch tile: large (amortizes per-grid-step overhead), multiple of 8,
    # but never far bigger than the batch itself for tiny calls.
    TB = min(batch_tile, _round_up(B, 8))
    num_tiles = pl.cdiv(B, TB)
    # v7x megacore: prefer an even tile count (>=2) when there is enough work,
    # so the "parallel" grid axis splits evenly across the two TensorCores.
    if num_tiles % 2 == 1 and B > 16:
        TB = _round_up(pl.cdiv(B, num_tiles + 1), 8)
        num_tiles = pl.cdiv(B, TB)

    w1, b1 = params["w1"], params["b1"]
    w2, b2 = params["w2"], params["b2"]
    w3, b3 = params["w3"], params["b3"]
    w4, b4 = params["w4"], params["b4"]

    # Weights/biases stay VMEM-resident across all batch tiles (constant index map).
    def resident(arr):
        return pl.BlockSpec(arr.shape, lambda i: (0, 0))

    out = pl.pallas_call(
        _mlp_kernel,
        out_shape=jax.ShapeDtypeStruct((B, 2), jnp.float32),
        grid=(num_tiles,),
        in_specs=[pl.BlockSpec((TB, F), lambda i: (i, 0)),
                  resident(w1), resident(b1),
                  resident(w2), resident(b2),
                  resident(w3), resident(b3),
                  resident(w4), resident(b4)],
        out_specs=pl.BlockSpec((TB, 2), lambda i: (i, 0)),
        compiler_params=pltpu.CompilerParams(
            dimension_semantics=("parallel",)),
    )(x, w1, b1, w2, b2, w3, b3, w4, b4)

    return out


def init_params(key, input_size=24):
    """Deterministic init mimicking PyTorch Linear default U[-1/sqrt(fan_in), 1/sqrt(fan_in)]."""
    sizes = [(input_size, 64), (64, 32), (32, 16), (16, 2)]
    params = {}
    keys = jax.random.split(key, 2 * len(sizes))
    for i, (fin, fout) in enumerate(sizes):
        bound = 1.0 / jnp.sqrt(jnp.float32(fin))
        w = jax.random.uniform(keys[2 * i], (fin, fout), jnp.float32, -bound, bound)
        b = jax.random.uniform(keys[2 * i + 1], (1, fout), jnp.float32, -bound, bound)
        params[f"w{i + 1}"] = w
        params[f"b{i + 1}"] = b
    return params


def _reference(x, p):
    h = jnp.maximum(x @ p["w1"] + p["b1"], 0.0)
    h = jnp.maximum(h @ p["w2"] + p["b2"], 0.0)
    h = jnp.maximum(h @ p["w3"] + p["b3"], 0.0)
    return h @ p["w4"] + p["b4"]


if __name__ == "__main__":
    key = jax.random.PRNGKey(0)
    k_params, k_x1, k_x2 = jax.random.split(key, 3)

    params = init_params(k_params, input_size=24)

    # Small example consistent with the module: batch=8, input_size=24.
    x_small = jax.random.normal(k_x1, (8, 24), jnp.float32)
    out_small = jax.block_until_ready(simple_file_security_net(x_small, params))
    ref_small = _reference(x_small, params)
    assert out_small.shape == (8, 2), out_small.shape
    assert jnp.allclose(out_small, ref_small, atol=2e-2, rtol=2e-2), \
        "mismatch vs pure-JAX reference (small batch)"

    # Exercise the multi-tile + ragged-tail (partial last block) path.
    x_big = jax.random.normal(k_x2, (1000, 24), jnp.float32)
    out_big = jax.block_until_ready(simple_file_security_net(x_big, params))
    ref_big = _reference(x_big, params)
    assert out_big.shape == (1000, 2), out_big.shape
    assert jnp.allclose(out_big, ref_big, atol=2e-2, rtol=2e-2), \
        "mismatch vs pure-JAX reference (tiled batch)"

    print("KERNEL_OK")
</pallas_src>

<mosaic_0001>
module attributes {stable_mosaic.version = 11 : i64} {
  func.func @_mlp_kernel(%arg0: i32, %arg1: memref<8x24xf32, #tpu.memory_space<vmem>>, %arg2: memref<24x64xf32, #tpu.memory_space<vmem>>, %arg3: memref<1x64xf32, #tpu.memory_space<vmem>>, %arg4: memref<64x32xf32, #tpu.memory_space<vmem>>, %arg5: memref<1x32xf32, #tpu.memory_space<vmem>>, %arg6: memref<32x16xf32, #tpu.memory_space<vmem>>, %arg7: memref<1x16xf32, #tpu.memory_space<vmem>>, %arg8: memref<16x2xf32, #tpu.memory_space<vmem>>, %arg9: memref<1x2xf32, #tpu.memory_space<vmem>>, %arg10: memref<8x2xf32, #tpu.memory_space<vmem>>) attributes {dimension_semantics = [#tpu.dimension_semantics<parallel>], iteration_bounds = array<i64: 1>, scalar_prefetch = 0 : i64, scratch_operands = 0 : i64, tpu.core_type = #tpu.core_type<tc>, window_params = [{transform_indices = @transform_0, window_bounds = array<i64: 8, 24>}, {pipeline_mode = #tpu.pipeline_mode<synchronous>, transform_indices = @transform_1, window_bounds = array<i64: 24, 64>}, {pipeline_mode = #tpu.pipeline_mode<synchronous>, transform_indices = @transform_2, window_bounds = array<i64: 1, 64>}, {pipeline_mode = #tpu.pipeline_mode<synchronous>, transform_indices = @transform_3, window_bounds = array<i64: 64, 32>}, {pipeline_mode = #tpu.pipeline_mode<synchronous>, transform_indices = @transform_4, window_bounds = array<i64: 1, 32>}, {pipeline_mode = #tpu.pipeline_mode<synchronous>, transform_indices = @transform_5, window_bounds = array<i64: 32, 16>}, {pipeline_mode = #tpu.pipeline_mode<synchronous>, transform_indices = @transform_6, window_bounds = array<i64: 1, 16>}, {pipeline_mode = #tpu.pipeline_mode<synchronous>, transform_indices = @transform_7, window_bounds = array<i64: 16, 2>}, {pipeline_mode = #tpu.pipeline_mode<synchronous>, transform_indices = @transform_8, window_bounds = array<i64: 1, 2>}, {transform_indices = @transform_9, window_bounds = array<i64: 8, 2>}]} {
    %c0 = arith.constant 0 : index
    %c0_0 = arith.constant 0 : index
    %0 = vector.load %arg1[%c0, %c0_0] : memref<8x24xf32, #tpu.memory_space<vmem>>, vector<8x24xf32>
    %c0_1 = arith.constant 0 : index
    %c0_2 = arith.constant 0 : index
    %1 = vector.load %arg2[%c0_1, %c0_2] : memref<24x64xf32, #tpu.memory_space<vmem>>, vector<24x64xf32>
    %cst = arith.constant dense<0.000000e+00> : vector<8x64xf32>
    %2 = tpu.matmul %0, %1, %cst {dimension_numbers = #tpu.dot_dimension_numbers<[1], [0], [0], [1], [0, 0, 1, 1], [], []>} : vector<8x24xf32>, vector<24x64xf32>, vector<8x64xf32> -> vector<8x64xf32>
    %c0_3 = arith.constant 0 : index
    %c0_4 = arith.constant 0 : index
    %3 = vector.load %arg3[%c0_3, %c0_4] : memref<1x64xf32, #tpu.memory_space<vmem>>, vector<1x64xf32>
    %4 = vector.broadcast %3 : vector<1x64xf32> to vector<8x64xf32>
    %5 = arith.addf %2, %4 : vector<8x64xf32>
    %cst_5 = arith.constant 0.000000e+00 : f32
    %6 = vector.broadcast %cst_5 : f32 to vector<8x64xf32>
    %7 = arith.maximumf %5, %6 : vector<8x64xf32>
    %c0_6 = arith.constant 0 : index
    %c0_7 = arith.constant 0 : index
    %8 = vector.load %arg4[%c0_6, %c0_7] : memref<64x32xf32, #tpu.memory_space<vmem>>, vector<64x32xf32>
    %cst_8 = arith.constant dense<0.000000e+00> : vector<8x32xf32>
    %9 = tpu.matmul %7, %8, %cst_8 {dimension_numbers = #tpu.dot_dimension_numbers<[1], [0], [0], [1], [0, 0, 1, 1], [], []>} : vector<8x64xf32>, vector<64x32xf32>, vector<8x32xf32> -> vector<8x32xf32>
    %c0_9 = arith.constant 0 : index
    %c0_10 = arith.constant 0 : index
    %10 = vector.load %arg5[%c0_9, %c0_10] : memref<1x32xf32, #tpu.memory_space<vmem>>, vector<1x32xf32>
    %11 = vector.broadcast %10 : vector<1x32xf32> to vector<8x32xf32>
    %12 = arith.addf %9, %11 : vector<8x32xf32>
    %cst_11 = arith.constant 0.000000e+00 : f32
    %13 = vector.broadcast %cst_11 : f32 to vector<8x32xf32>
    %14 = arith.maximumf %12, %13 : vector<8x32xf32>
    %c0_12 = arith.constant 0 : index
    %c0_13 = arith.constant 0 : index
    %15 = vector.load %arg6[%c0_12, %c0_13] : memref<32x16xf32, #tpu.memory_space<vmem>>, vector<32x16xf32>
    %cst_14 = arith.constant dense<0.000000e+00> : vector<8x16xf32>
    %16 = tpu.matmul %14, %15, %cst_14 {dimension_numbers = #tpu.dot_dimension_numbers<[1], [0], [0], [1], [0, 0, 1, 1], [], []>} : vector<8x32xf32>, vector<32x16xf32>, vector<8x16xf32> -> vector<8x16xf32>
    %c0_15 = arith.constant 0 : index
    %c0_16 = arith.constant 0 : index
    %17 = vector.load %arg7[%c0_15, %c0_16] : memref<1x16xf32, #tpu.memory_space<vmem>>, vector<1x16xf32>
    %18 = vector.broadcast %17 : vector<1x16xf32> to vector<8x16xf32>
    %19 = arith.addf %16, %18 : vector<8x16xf32>
    %cst_17 = arith.constant 0.000000e+00 : f32
    %20 = vector.broadcast %cst_17 : f32 to vector<8x16xf32>
    %21 = arith.maximumf %19, %20 : vector<8x16xf32>
    %c0_18 = arith.constant 0 : index
    %c0_19 = arith.constant 0 : index
    %22 = vector.load %arg8[%c0_18, %c0_19] : memref<16x2xf32, #tpu.memory_space<vmem>>, vector<16x2xf32>
    %cst_20 = arith.constant dense<0.000000e+00> : vector<8x2xf32>
    %23 = tpu.matmul %21, %22, %cst_20 {dimension_numbers = #tpu.dot_dimension_numbers<[1], [0], [0], [1], [0, 0, 1, 1], [], []>} : vector<8x16xf32>, vector<16x2xf32>, vector<8x2xf32> -> vector<8x2xf32>
    %c0_21 = arith.constant 0 : index
    %c0_22 = arith.constant 0 : index
    %24 = vector.load %arg9[%c0_21, %c0_22] : memref<1x2xf32, #tpu.memory_space<vmem>>, vector<1x2xf32>
    %25 = vector.broadcast %24 : vector<1x2xf32> to vector<8x2xf32>
    %26 = arith.addf %23, %25 : vector<8x2xf32>
    %c0_23 = arith.constant 0 : index
    %c0_24 = arith.constant 0 : index
    %27 = vector.load %arg10[%c0_23, %c0_24] : memref<8x2xf32, #tpu.memory_space<vmem>>, vector<8x2xf32>
    tpu.vector_store %arg10[%c0_23, %c0_24], %26 {strides = array<i32>} : memref<8x2xf32, #tpu.memory_space<vmem>>, vector<8x2xf32>,
    return
  }
  func.func @transform_0(%arg0: i32) -> (i32, i32) {
    %c0_i32 = arith.constant 0 : i32
    %c0_i32_0 = arith.constant 0 : i32
    return %arg0, %c0_i32 : i32, i32
  }
  func.func @transform_1(%arg0: i32) -> (i32, i32) {
    %c0_i32 = arith.constant 0 : i32
    %c0_i32_0 = arith.constant 0 : i32
    %c0_i32_1 = arith.constant 0 : i32
    return %c0_i32, %c0_i32_0 : i32, i32
  }
  func.func @transform_2(%arg0: i32) -> (i32, i32) {
    %c0_i32 = arith.constant 0 : i32
    %c0_i32_0 = arith.constant 0 : i32
    %c0_i32_1 = arith.constant 0 : i32
    return %c0_i32, %c0_i32_0 : i32, i32
  }
  func.func @transform_3(%arg0: i32) -> (i32, i32) {
    %c0_i32 = arith.constant 0 : i32
    %c0_i32_0 = arith.constant 0 : i32
    %c0_i32_1 = arith.constant 0 : i32
    return %c0_i32, %c0_i32_0 : i32, i32
  }
  func.func @transform_4(%arg0: i32) -> (i32, i32) {
    %c0_i32 = arith.constant 0 : i32
    %c0_i32_0 = arith.constant 0 : i32
    %c0_i32_1 = arith.constant 0 : i32
    return %c0_i32, %c0_i32_0 : i32, i32
  }
  func.func @transform_5(%arg0: i32) -> (i32, i32) {
    %c0_i32 = arith.constant 0 : i32
    %c0_i32_0 = arith.constant 0 : i32
    %c0_i32_1 = arith.constant 0 : i32
    return %c0_i32, %c0_i32_0 : i32, i32
  }
  func.func @transform_6(%arg0: i32) -> (i32, i32) {
    %c0_i32 = arith.constant 0 : i32
    %c0_i32_0 = arith.constant 0 : i32
    %c0_i32_1 = arith.constant 0 : i32
    return %c0_i32, %c0_i32_0 : i32, i32
  }
  func.func @transform_7(%arg0: i32) -> (i32, i32) {
    %c0_i32 = arith.constant 0 : i32
    %c0_i32_0 = arith.constant 0 : i32
    %c0_i32_1 = arith.constant 0 : i32
    return %c0_i32, %c0_i32_0 : i32, i32
  }
  func.func @transform_8(%arg0: i32) -> (i32, i32) {
    %c0_i32 = arith.constant 0 : i32
    %c0_i32_0 = arith.constant 0 : i32
    %c0_i32_1 = arith.constant 0 : i32
    return %c0_i32, %c0_i32_0 : i32, i32
  }
  func.func @transform_9(%arg0: i32) -> (i32, i32) {
    %c0_i32 = arith.constant 0 : i32
    %c0_i32_0 = arith.constant 0 : i32
    return %arg0, %c0_i32 : i32, i32
  }
}

</mosaic_0001>

<llo_original>
// kernel: tpu_custom_call.1
$region0: #{tpu_custom_call.1}
  #allocation0 [shape = 'u32[]', space=smem, size = 0x4, offset = 0x4, fixed_abs, tag = 'smem constant byte address 0x4 - core index']
  #allocation1 [shape = 'u32[72,128]{1,0:T(1,128)}', space=vmem, size = 0x9000, scoped, tag = 'internal scratch']
  %s0 = inlined_call_operand.vmem [shape: f32[8,24], index: 0, kind: input, shape index: {}]
  %s1 = inlined_call_operand.vmem [shape: f32[24,64], index: 1, kind: input, shape index: {}]
  %s2 = inlined_call_operand.vmem [shape: f32[1,64], index: 2, kind: input, shape index: {}]
  %s3 = inlined_call_operand.vmem [shape: f32[64,32], index: 3, kind: input, shape index: {}]
  %s4 = inlined_call_operand.vmem [shape: f32[1,32], index: 4, kind: input, shape index: {}]
  %s5 = inlined_call_operand.vmem [shape: f32[32,16], index: 5, kind: input, shape index: {}]
  %s6 = inlined_call_operand.vmem [shape: f32[1,16], index: 6, kind: input, shape index: {}]
  %s7 = inlined_call_operand.vmem [shape: f32[16,2], index: 7, kind: input, shape index: {}]
  %s8 = inlined_call_operand.vmem [shape: f32[1,2], index: 8, kind: input, shape index: {}]
  %s9 = inlined_call_operand.vmem [shape: f32[8,2], index: 9, kind: output, shape index: {}]
  %s10 = sld [smem:[#allocation0]]
  $region46: #{tpu_custom_call.1} parent=0
    _
  %s12 = ssub.s32 1, %s10
  %s13 = scalar_select 0, %s12, %s10
  // Predicated region
  $region2: #{tpu_custom_call.1} parent=0 // pred_check
    _
  $region3: #{tpu_custom_call.1} parent=0 // pred_check_branch
    %15 = sbr.rel (0) target = $region5
  $region4: #{tpu_custom_call.1} parent=0 // pred_region
    _
  $region5: #{tpu_custom_call.1} parent=0 // pred_fallthru
    _
  // Predicated region
  $region6: #{tpu_custom_call.1} parent=0 // pred_check
    _
  $region7: #{tpu_custom_call.1} parent=0 // pred_check_branch
    %17 = sbr.rel (0) target = $region9
  $region8: #{tpu_custom_call.1} parent=0 // pred_region
    _
  $region9: #{tpu_custom_call.1} parent=0 // pred_fallthru
    _
  // Predicated region
  $region10: #{tpu_custom_call.1} parent=0 // pred_check
    _
  $region11: #{tpu_custom_call.1} parent=0 // pred_check_branch
    %19 = sbr.rel (0) target = $region13
  $region12: #{tpu_custom_call.1} parent=0 // pred_region
    _
  $region13: #{tpu_custom_call.1} parent=0 // pred_fallthru
    _
  // Predicated region
  $region14: #{tpu_custom_call.1} parent=0 // pred_check
    _
  $region15: #{tpu_custom_call.1} parent=0 // pred_check_branch
    %21 = sbr.rel (0) target = $region17
  $region16: #{tpu_custom_call.1} parent=0 // pred_region
    _
  $region17: #{tpu_custom_call.1} parent=0 // pred_fallthru
    _
  // Predicated region
  $region18: #{tpu_custom_call.1} parent=0 // pred_check
    _
  $region19: #{tpu_custom_call.1} parent=0 // pred_check_branch
    %23 = sbr.rel (0) target = $region21
  $region20: #{tpu_custom_call.1} parent=0 // pred_region
    _
  $region21: #{tpu_custom_call.1} parent=0 // pred_fallthru
    _
  // Predicated region
  $region22: #{tpu_custom_call.1} parent=0 // pred_check
    _
  $region23: #{tpu_custom_call.1} parent=0 // pred_check_branch
    %25 = sbr.rel (0) target = $region25
  $region24: #{tpu_custom_call.1} parent=0 // pred_region
    _
  $region25: #{tpu_custom_call.1} parent=0 // pred_fallthru
    _
  // Predicated region
  $region26: #{tpu_custom_call.1} parent=0 // pred_check
    _
  $region27: #{tpu_custom_call.1} parent=0 // pred_check_branch
    %27 = sbr.rel (0) target = $region29
  $region28: #{tpu_custom_call.1} parent=0 // pred_region
    _
  $region29: #{tpu_custom_call.1} parent=0 // pred_fallthru
    _
  // Predicated region
  $region30: #{tpu_custom_call.1} parent=0 // pred_check
    _
  $region31: #{tpu_custom_call.1} parent=0 // pred_check_branch
    %29 = sbr.rel (0) target = $region33
  $region32: #{tpu_custom_call.1} parent=0 // pred_region
    _
  $region33: #{tpu_custom_call.1} parent=0 // pred_fallthru
    _
  // Predicated region
  $region34: #{tpu_custom_call.1} parent=0 // pred_check
    _
  $region35: #{tpu_custom_call.1} parent=0 // pred_check_branch
    %31 = sbr.rel (0) target = $region37
  $region36: #{tpu_custom_call.1} parent=0 // pred_region
    _
  $region37: #{tpu_custom_call.1} parent=0 // pred_fallthru
    _
  %v32 = vld [vmem:[%s0] sm:$0xff]
  %v33 = vld [vmem:[%s1] sm:$0xff]
  %v34 = vld [vmem:[%s1 + $0x8] sm:$0xff]
  %v35 = vld [vmem:[%s1 + $0x10] sm:$0xff]
  %v36 = vld [vmem:[%s2] sm:$0x1]
  %v38 = vperm.slane %v36, 0
  %vm40 = vcmask 195584
  %v42 = vsel %vm40, %v32, 0
  %44 = vmatpush.msra.mxu0 0.0
  %45 = vmatpush.msra.mxu0 0.0
  %46 = vmatpush.msra.mxu0 0.0
  %47 = vmatpush.msra.mxu0 0.0
  %48 = vmatpush.msra.mxu0 0.0
  %49 = vmatpush.msra.mxu0 0.0
  %50 = vmatpush.msra.mxu0 0.0
  %51 = vmatpush.msra.mxu0 0.0
  %52 = vmatpush.msra.mxu0 0.0
  %53 = vmatpush.msra.mxu0 0.0
  %54 = vmatpush.msra.mxu0 0.0
  %55 = vmatpush.msra.mxu0 0.0
  %56 = vmatpush.msra.mxu0 0.0
  %57 = vmatpush.msra.mxu0 %v35
  %58 = vmatpush.msra.mxu0 %v34
  %59 = vmatpush.msra.mxu0 %v33
  %60 = vmatmul.f32.gmra.mxu0 %v42
  %v61 = vpop.f32.mrf.mxu0
  %v62 = vadd.f32 %v38, %v61
  %63 = vdwg.mxu0
  %v64 = vmax.f32 %v62, 0.0
  %v65 = vld [vmem:[%s3] sm:$0xff]
  %v66 = vld [vmem:[%s3 + $0x8] sm:$0xff]
  %v67 = vld [vmem:[%s3 + $0x10] sm:$0xff]
  %v68 = vld [vmem:[%s3 + $0x18] sm:$0xff]
  %v69 = vld [vmem:[%s3 + $0x20] sm:$0xff]
  %v70 = vld [vmem:[%s3 + $0x28] sm:$0xff]
  %v71 = vld [vmem:[%s3 + $0x30] sm:$0xff]
  %v72 = vld [vmem:[%s3 + $0x38] sm:$0xff]
  %v73 = vld [vmem:[%s4] sm:$0x1]
  %v75 = vperm.slane %v73, 0
  %vm77 = vcmask 523264
  %v79 = vsel %vm77, %v64, 0
  %81 = vmatpush.msra.mxu0 0.0
  %82 = vmatpush.msra.mxu0 0.0
  %83 = vmatpush.msra.mxu0 0.0
  %84 = vmatpush.msra.mxu0 0.0
  %85 = vmatpush.msra.mxu0 0.0
  %86 = vmatpush.msra.mxu0 0.0
  %87 = vmatpush.msra.mxu0 0.0
  %88 = vmatpush.msra.mxu0 0.0
  %89 = vmatpush.msra.mxu0 %v72
  %90 = vmatpush.msra.mxu0 %v71
  %91 = vmatpush.msra.mxu0 %v70
  %92 = vmatpush.msra.mxu0 %v69
  %93 = vmatpush.msra.mxu0 %v68
  %94 = vmatpush.msra.mxu0 %v67
  %95 = vmatpush.msra.mxu0 %v66
  %96 = vmatpush.msra.mxu0 %v65
  %97 = vmatmul.f32.gmra.mxu0 %v79
  %v98 = vpop.f32.mrf.mxu0
  %v99 = vadd.f32 %v75, %v98
  %100 = vdwg.mxu0
  %v101 = vmax.f32 %v99, 0.0
  %v102 = vld [vmem:[%s5] sm:$0xff]
  %v103 = vld [vmem:[%s5 + $0x8] sm:$0xff]
  %v104 = vld [vmem:[%s5 + $0x10] sm:$0xff]
  %v105 = vld [vmem:[%s5 + $0x18] sm:$0xff]
  %v106 = vld [vmem:[%s6] sm:$0x1]
  %v108 = vperm.slane %v106, 0
  %vm110 = vcmask 261120
  %v112 = vsel %vm110, %v101, 0
  %114 = vmatpush.msra.mxu0 0.0
  %115 = vmatpush.msra.mxu0 0.0
  %116 = vmatpush.msra.mxu0 0.0
  %117 = vmatpush.msra.mxu0 0.0
  %118 = vmatpush.msra.mxu0 0.0
  %119 = vmatpush.msra.mxu0 0.0
  %120 = vmatpush.msra.mxu0 0.0
  %121 = vmatpush.msra.mxu0 0.0
  %122 = vmatpush.msra.mxu0 0.0
  %123 = vmatpush.msra.mxu0 0.0
  %124 = vmatpush.msra.mxu0 0.0
  %125 = vmatpush.msra.mxu0 0.0
  %126 = vmatpush.msra.mxu0 %v105
  %127 = vmatpush.msra.mxu0 %v104
  %128 = vmatpush.msra.mxu0 %v103
  %129 = vmatpush.msra.mxu0 %v102
  %130 = vmatmul.f32.gmra.mxu0 %v112
  %v131 = vpop.f32.mrf.mxu0
  %v132 = vadd.f32 %v108, %v131
  %133 = vdwg.mxu0
  %v134 = vmax.f32 %v132, 0.0
  %v135 = vld [vmem:[%s7] sm:$0xff]
  %v136 = vld [vmem:[%s7 + $0x8] sm:$0xff]
  %v137 = vld [vmem:[%s8] sm:$0x1]
  %v139 = vperm.slane %v137, 0
  %vm141 = vcmask 130048
  %v143 = vsel %vm141, %v134, 0
  %145 = vmatpush.msra.mxu0 0.0
  %146 = vmatpush.msra.mxu0 0.0
  %147 = vmatpush.msra.mxu0 0.0
  %148 = vmatpush.msra.mxu0 0.0
  %149 = vmatpush.msra.mxu0 0.0
  %150 = vmatpush.msra.mxu0 0.0
  %151 = vmatpush.msra.mxu0 0.0
  %152 = vmatpush.msra.mxu0 0.0
  %153 = vmatpush.msra.mxu0 0.0
  %154 = vmatpush.msra.mxu0 0.0
  %155 = vmatpush.msra.mxu0 0.0
  %156 = vmatpush.msra.mxu0 0.0
  %157 = vmatpush.msra.mxu0 0.0
  %158 = vmatpush.msra.mxu0 0.0
  %159 = vmatpush.msra.mxu0 %v136
  %160 = vmatpush.msra.mxu0 %v135
  %161 = vmatmul.f32.gmra.mxu0 %v143
  %v162 = vpop.f32.mrf.mxu0
  %v163 = vadd.f32 %v139, %v162
  %164 = vdwg.mxu0
  %vm165 = vcmask 15360
  %166 = vst.msk [vmem:[%s9] sm:$0xff] %vm165, %v163
  // Predicated region
  $region38: #{tpu_custom_call.1} parent=0 // pred_check
    _
  $region39: #{tpu_custom_call.1} parent=0 // pred_check_branch
    %168 = sbr.rel (0) target = $region41
  $region40: #{tpu_custom_call.1} parent=0 // pred_region
    _
  $region41: #{tpu_custom_call.1} parent=0 // pred_fallthru
    _
  // Predicated region
  $region42: #{tpu_custom_call.1} parent=0 // pred_check
    _
  $region43: #{tpu_custom_call.1} parent=0 // pred_check_branch
    %170 = sbr.rel (0) target = $region45
  $region44: #{tpu_custom_call.1} parent=0 // pred_region
    _
  $region45: #{tpu_custom_call.1} parent=0 // pred_fallthru
    _

</llo_original>
